<compile_context>
chip_gen: v7x
topology: tpu7x:2x2x1
jax: 0.10.0
libtpu: 0.0.40
codegen_flags: <defaults>
</compile_context>

<pallas_src>
import functools

import jax
import jax.numpy as jnp
from jax.experimental import pallas as pl
from jax.experimental.pallas import tpu as pltpu


# --------------------------------------------------------------------------- #
# Kernel 1: q / k / v projections on the UN-gathered x (MXU matmuls).
# --------------------------------------------------------------------------- #
def _proj_kernel(x_ref, wq_ref, wk_ref, wv_ref, q_ref, k_ref, v_ref):
    x = x_ref[...]                                     # (TM, C)
    # Operands kept in the input dtype (f32) with f32 accumulation to preserve
    # reference numerics; on v6e/v7x one could pre-cast x/weights to bf16 for
    # 2x MXU throughput (accumulation stays f32).
    q_ref[...] = jnp.dot(x, wq_ref[...],
                         preferred_element_type=jnp.float32).astype(q_ref.dtype)
    k_ref[...] = jnp.dot(x, wk_ref[...],
                         preferred_element_type=jnp.float32).astype(k_ref.dtype)
    v_ref[...] = jnp.dot(x, wv_ref[...],
                         preferred_element_type=jnp.float32).astype(v_ref.dtype)


# --------------------------------------------------------------------------- #
# Kernel 2: in-kernel gather (one-hot MXU matmul) + attention + out projection.
# --------------------------------------------------------------------------- #
def _attn_kernel(g_ref, q_ref, k_ref, v_ref, wout_ref, bout_ref, o_ref, *,
                 n_heads, dim_head):
    TN = q_ref.shape[1]            # query tile size
    NK = g_ref.shape[2]            # keys per query (== N for this module)
    N = k_ref.shape[1]             # total points
    inner = n_heads * dim_head
    c_pad = o_ref.shape[2]         # lane-dense (padded to multiple of 128)

    idx = g_ref[0]                 # (TN, NK) int32: key row used at slot j of query n
    q = q_ref[0]                   # (TN, inner)   (attention scale folded into w_q)
    k_all = k_ref[0]               # (N, inner)
    v_all = v_ref[0]               # (N, inner)

    # Row gather expressed as a one-hot selection matmul -> runs on the MXU and
    # the gathered (B,K,N,C) tensor never exists in HBM.
    sel = (idx[:, :, None] ==
           jax.lax.broadcasted_iota(jnp.int32, (TN, NK, N), 2)).astype(jnp.float32)
    sel2 = sel.reshape(TN * NK, N)
    kg = jnp.dot(sel2, k_all,
                 preferred_element_type=jnp.float32).reshape(TN, NK, inner)
    vg = jnp.dot(sel2, v_all,
                 preferred_element_type=jnp.float32).reshape(TN, NK, inner)

    # Per-head attention.  Heads stay a (small) static loop so every contraction
    # is a single-batch-dim dot_general; head outputs are folded directly into
    # the output projection (y += oh @ w_out[h]) instead of a lane concatenate.
    y = jnp.zeros((TN, c_pad), jnp.float32)
    for h in range(n_heads):
        lo = h * dim_head
        qh = q[:, None, lo:lo + dim_head]              # (TN, 1, d)
        kh = kg[:, :, lo:lo + dim_head]                # (TN, NK, d)
        vh = vg[:, :, lo:lo + dim_head]                # (TN, NK, d)

        dots = jnp.einsum('nqd,njd->nqj', qh, kh,
                          preferred_element_type=jnp.float32)       # (TN, 1, NK)
        m = jnp.max(dots, axis=-1, keepdims=True)
        e = jnp.exp(dots - m)
        denom = jnp.sum(e, axis=-1, keepdims=True)
        attn = e * pl.reciprocal(denom, approx=True)                 # EUP reciprocal

        oh = jnp.einsum('nqj,njd->nqd', attn, vh,
                        preferred_element_type=jnp.float32)[:, 0, :]  # (TN, d)
        y = y + jnp.dot(oh, wout_ref[lo:lo + dim_head, :],
                        preferred_element_type=jnp.float32)
    y = y + bout_ref[...]
    o_ref[0] = y.astype(o_ref.dtype)


def _knn_indices(pos, k):
    # TODO(synk): knn (top-k over pairwise distances) has no clean Pallas TPU
    # equivalent; kept as plain-JAX glue feeding the kernels.
    diff = pos[:, :, None, :] - pos[:, None, :, :]
    d2 = jnp.sum(diff * diff, axis=-1)                 # (B, N, N)
    _, idx = jax.lax.top_k(-d2, k)                     # ascending distance
    return idx.astype(jnp.int32)                       # (B, N, K)


def self_attention_knn(x, center_pos3d, params, *, n_heads, dim_head, neighbor_num):
    B, N, C = x.shape
    K = neighbor_num
    # The literal permute(0,3,2,1) + einsum in the PyTorch code requires this.
    assert K == N, "SelfAttentionKNN as written only typechecks when neighbor_num == N"
    inner = n_heads * dim_head
    scale = dim_head ** (-0.5)

    knn_id = _knn_indices(center_pos3d, K)             # (B, N, K)
    # g[b, n, j] = knn_id[b, j, n]: key index used at slot j of query point n
    g = jnp.transpose(knn_id, (0, 2, 1))               # (B, N, N) int32

    # Fold the attention scale into w_q (free at trace time); split w_kv so the
    # kernel never lane-slices a fused kv buffer.
    w_q = params["w_q"] * scale
    w_k = params["w_kv"][:, :inner]
    w_v = params["w_kv"][:, inner:]

    # Lane-dense output: pad the channel dim to a multiple of 128 so output
    # stores are unmasked; sliced back below.  (No-op when C % 128 == 0.)
    c_pad = ((C + 127) // 128) * 128
    w_out, b_out = params["w_out"], params["b_out"]
    if c_pad != C:
        w_out = jnp.pad(w_out, ((0, 0), (0, c_pad - C)))
        b_out = jnp.pad(b_out, ((0, 0), (0, c_pad - C)))

    # ---- Kernel 1: projections (project BEFORE gathering) -------------------
    rows = B * N
    tm = rows if rows <= 512 else 512
    x2d = x.reshape(rows, C)
    q2d, k2d, v2d = pl.pallas_call(
        _proj_kernel,
        out_shape=[jax.ShapeDtypeStruct((rows, inner), jnp.float32)] * 3,
        grid=(pl.cdiv(rows, tm),),
        in_specs=[
            pl.BlockSpec((tm, C), lambda i: (i, 0)),
            # NOTE: weight blocks are grid-invariant; pipeline_mode=pl.Buffered(1)
            # would single-buffer them (saves VMEM on v7x); default kept for
            # portability.
            pl.BlockSpec((C, inner), lambda i: (0, 0)),
            pl.BlockSpec((C, inner), lambda i: (0, 0)),
            pl.BlockSpec((C, inner), lambda i: (0, 0)),
        ],
        out_specs=[
            pl.BlockSpec((tm, inner), lambda i: (i, 0)),
            pl.BlockSpec((tm, inner), lambda i: (i, 0)),
            pl.BlockSpec((tm, inner), lambda i: (i, 0)),
        ],
        compiler_params=pltpu.CompilerParams(dimension_semantics=("parallel",)),
    )(x2d, w_q, w_k, w_v)
    q = q2d.reshape(B, N, inner)
    k = k2d.reshape(B, N, inner)
    v = v2d.reshape(B, N, inner)

    # ---- Kernel 2: gather + attention + out projection -----------------------
    # Query axis is tiled so the working set stays bounded and both grid axes
    # are "parallel" (megacore / v7x 2-TC sharding).  Halve tn for v7x's 64 MiB
    # VMEM if the one-hot / gathered buffers get large.
    tn = N if N <= 128 else 128
    nt = pl.cdiv(N, tn)

    flops = (2 * 2 * tn * N * N * inner        # one-hot gathers (MXU)
             + 2 * 2 * tn * N * inner          # dots + attn@v over all heads
             + 2 * tn * inner * c_pad) * (B * nt)
    transcendentals = (n_heads * tn * N + n_heads * tn) * (B * nt)
    bytes_accessed = 4 * (tn * N + tn * inner + 2 * N * inner
                          + inner * c_pad + c_pad + tn * c_pad) * (B * nt)

    kernel = functools.partial(_attn_kernel, n_heads=n_heads, dim_head=dim_head)
    out = pl.pallas_call(
        kernel,
        out_shape=jax.ShapeDtypeStruct((B, N, c_pad), x.dtype),
        grid=(B, nt),
        in_specs=[
            pl.BlockSpec((1, tn, N), lambda b, t: (b, t, 0)),       # gather idx
            pl.BlockSpec((1, tn, inner), lambda b, t: (b, t, 0)),   # q tile
            pl.BlockSpec((1, N, inner), lambda b, t: (b, 0, 0)),    # full k
            pl.BlockSpec((1, N, inner), lambda b, t: (b, 0, 0)),    # full v
            pl.BlockSpec((inner, c_pad), lambda b, t: (0, 0)),
            pl.BlockSpec((1, c_pad), lambda b, t: (0, 0)),
        ],
        out_specs=pl.BlockSpec((1, tn, c_pad), lambda b, t: (b, t, 0)),
        compiler_params=pltpu.CompilerParams(
            dimension_semantics=("parallel", "parallel")),
        cost_estimate=pl.CostEstimate(flops=int(flops),
                                      transcendentals=int(transcendentals),
                                      bytes_accessed=int(bytes_accessed)),
    )(g, q, k, v, w_out, b_out)

    if c_pad != C:
        out = out[..., :C]
    return out


def _reference(x, knn_x, params, n_heads, dim_head):
    """Pure-JAX mirror of the PyTorch forward (for correctness check)."""
    B, N, C = x.shape
    K = knn_x.shape[1]
    inner = n_heads * dim_head
    scale = dim_head ** (-0.5)
    hp = jax.lax.Precision.HIGHEST

    q = jnp.einsum('bnc,ci->bni', x, params["w_q"], precision=hp)              # (B,N,inner)
    kv = jnp.einsum('bsnc,ci->bsni', knn_x, params["w_kv"], precision=hp)      # (B,K,N,2*inner)
    k, v = kv[..., :inner], kv[..., inner:]

    q = q.reshape(B, N, n_heads, dim_head).transpose(0, 2, 1, 3)[:, :, :, None, :]   # b h n 1 d
    k = k.reshape(B, K, N, n_heads, dim_head).transpose(0, 3, 1, 2, 4)               # b h K N d
    v = v.reshape(B, K, N, n_heads, dim_head).transpose(0, 3, 1, 2, 4)

    dots = jnp.einsum('bhnid,bhnjd->bhnij', q, k, precision=hp) * scale
    attn = jax.nn.softmax(dots, axis=-1)
    out = jnp.einsum('bhnij,bhnjd->bhnid', attn, v, precision=hp)[:, :, :, 0, :]     # b h n d
    out = out.transpose(0, 2, 1, 3).reshape(B, N, inner)                             # b n (h d)
    return jnp.einsum('bni,ic->bnc', out, params["w_out"], precision=hp) + params["b_out"][0]


if __name__ == "__main__":
    B, N, dim = 2, 8, 32
    n_heads, dim_head = 4, 8
    neighbor_num = 8          # must equal N for the literal reference code
    inner = n_heads * dim_head

    key = jax.random.PRNGKey(0)
    kx, kp, kq, kkv, ko = jax.random.split(key, 5)

    x = jax.random.normal(kx, (B, N, dim), dtype=jnp.float32)
    center_pos3d = jax.random.normal(kp, (B, N, 3), dtype=jnp.float32)

    params = {
        "w_q":  0.05 * jax.random.normal(kq,  (dim, inner), dtype=jnp.float32),
        "w_kv": 0.05 * jax.random.normal(kkv, (dim, 2 * inner), dtype=jnp.float32),
        "w_out": 0.05 * jax.random.normal(ko, (inner, dim), dtype=jnp.float32),
        "b_out": jnp.zeros((1, dim), dtype=jnp.float32),
    }

    out = self_attention_knn(x, center_pos3d, params,
                             n_heads=n_heads, dim_head=dim_head,
                             neighbor_num=neighbor_num)
    out = jax.block_until_ready(out)
    assert out.shape == (B, N, dim), out.shape

    # correctness check against a pure-JAX mirror of the PyTorch forward,
    # using the same knn indices as the kernel wrapper
    knn_id = _knn_indices(center_pos3d, neighbor_num)
    gathered = x[jnp.arange(B)[:, None, None], knn_id]        # x[b, knn_id[b,n,s], :]
    knn_x = jnp.transpose(gathered, (0, 2, 1, 3))             # (B, K, N, C)
    ref = _reference(x, knn_x, params, n_heads, dim_head)
    assert jnp.allclose(out, ref, atol=2e-3, rtol=2e-3), float(jnp.max(jnp.abs(out - ref)))

    print("KERNEL_OK")
</pallas_src>

<mosaic_0001>
module attributes {stable_mosaic.version = 11 : i64} {
  func.func @_proj_kernel(%arg0: i32, %arg1: memref<16x32xf32, #tpu.memory_space<vmem>>, %arg2: memref<32x32xf32, #tpu.memory_space<vmem>>, %arg3: memref<32x32xf32, #tpu.memory_space<vmem>>, %arg4: memref<32x32xf32, #tpu.memory_space<vmem>>, %arg5: memref<16x32xf32, #tpu.memory_space<vmem>>, %arg6: memref<16x32xf32, #tpu.memory_space<vmem>>, %arg7: memref<16x32xf32, #tpu.memory_space<vmem>>) attributes {dimension_semantics = [#tpu.dimension_semantics<parallel>], iteration_bounds = array<i64: 1>, scalar_prefetch = 0 : i64, scratch_operands = 0 : i64, tpu.core_type = #tpu.core_type<tc>, window_params = [{transform_indices = @transform_0, window_bounds = array<i64: 16, 32>}, {pipeline_mode = #tpu.pipeline_mode<synchronous>, transform_indices = @transform_1, window_bounds = array<i64: 32, 32>}, {pipeline_mode = #tpu.pipeline_mode<synchronous>, transform_indices = @transform_2, window_bounds = array<i64: 32, 32>}, {pipeline_mode = #tpu.pipeline_mode<synchronous>, transform_indices = @transform_3, window_bounds = array<i64: 32, 32>}, {transform_indices = @transform_4, window_bounds = array<i64: 16, 32>}, {transform_indices = @transform_5, window_bounds = array<i64: 16, 32>}, {transform_indices = @transform_6, window_bounds = array<i64: 16, 32>}]} {
    %c0 = arith.constant 0 : index
    %c0_0 = arith.constant 0 : index
    %0 = vector.load %arg1[%c0, %c0_0] : memref<16x32xf32, #tpu.memory_space<vmem>>, vector<16x32xf32>
    %c0_1 = arith.constant 0 : index
    %c0_2 = arith.constant 0 : index
    %1 = vector.load %arg2[%c0_1, %c0_2] : memref<32x32xf32, #tpu.memory_space<vmem>>, vector<32x32xf32>
    %cst = arith.constant dense<0.000000e+00> : vector<16x32xf32>
    %2 = tpu.matmul %0, %1, %cst {dimension_numbers = #tpu.dot_dimension_numbers<[1], [0], [0], [1], [0, 0, 1, 1], [], []>} : vector<16x32xf32>, vector<32x32xf32>, vector<16x32xf32> -> vector<16x32xf32>
    %c0_3 = arith.constant 0 : index
    %c0_4 = arith.constant 0 : index
    %3 = vector.load %arg5[%c0_3, %c0_4] : memref<16x32xf32, #tpu.memory_space<vmem>>, vector<16x32xf32>
    tpu.vector_store %arg5[%c0_3, %c0_4], %2 {strides = array<i32>} : memref<16x32xf32, #tpu.memory_space<vmem>>, vector<16x32xf32>,
    %c0_5 = arith.constant 0 : index
    %c0_6 = arith.constant 0 : index
    %4 = vector.load %arg3[%c0_5, %c0_6] : memref<32x32xf32, #tpu.memory_space<vmem>>, vector<32x32xf32>
    %cst_7 = arith.constant dense<0.000000e+00> : vector<16x32xf32>
    %5 = tpu.matmul %0, %4, %cst_7 {dimension_numbers = #tpu.dot_dimension_numbers<[1], [0], [0], [1], [0, 0, 1, 1], [], []>} : vector<16x32xf32>, vector<32x32xf32>, vector<16x32xf32> -> vector<16x32xf32>
    %c0_8 = arith.constant 0 : index
    %c0_9 = arith.constant 0 : index
    %6 = vector.load %arg6[%c0_8, %c0_9] : memref<16x32xf32, #tpu.memory_space<vmem>>, vector<16x32xf32>
    tpu.vector_store %arg6[%c0_8, %c0_9], %5 {strides = array<i32>} : memref<16x32xf32, #tpu.memory_space<vmem>>, vector<16x32xf32>,
    %c0_10 = arith.constant 0 : index
    %c0_11 = arith.constant 0 : index
    %7 = vector.load %arg4[%c0_10, %c0_11] : memref<32x32xf32, #tpu.memory_space<vmem>>, vector<32x32xf32>
    %cst_12 = arith.constant dense<0.000000e+00> : vector<16x32xf32>
    %8 = tpu.matmul %0, %7, %cst_12 {dimension_numbers = #tpu.dot_dimension_numbers<[1], [0], [0], [1], [0, 0, 1, 1], [], []>} : vector<16x32xf32>, vector<32x32xf32>, vector<16x32xf32> -> vector<16x32xf32>
    %c0_13 = arith.constant 0 : index
    %c0_14 = arith.constant 0 : index
    %9 = vector.load %arg7[%c0_13, %c0_14] : memref<16x32xf32, #tpu.memory_space<vmem>>, vector<16x32xf32>
    tpu.vector_store %arg7[%c0_13, %c0_14], %8 {strides = array<i32>} : memref<16x32xf32, #tpu.memory_space<vmem>>, vector<16x32xf32>,
    return
  }
  func.func @transform_0(%arg0: i32) -> (i32, i32) {
    %c0_i32 = arith.constant 0 : i32
    %c0_i32_0 = arith.constant 0 : i32
    return %arg0, %c0_i32 : i32, i32
  }
  func.func @transform_1(%arg0: i32) -> (i32, i32) {
    %c0_i32 = arith.constant 0 : i32
    %c0_i32_0 = arith.constant 0 : i32
    %c0_i32_1 = arith.constant 0 : i32
    return %c0_i32, %c0_i32_0 : i32, i32
  }
  func.func @transform_2(%arg0: i32) -> (i32, i32) {
    %c0_i32 = arith.constant 0 : i32
    %c0_i32_0 = arith.constant 0 : i32
    %c0_i32_1 = arith.constant 0 : i32
    return %c0_i32, %c0_i32_0 : i32, i32
  }
  func.func @transform_3(%arg0: i32) -> (i32, i32) {
    %c0_i32 = arith.constant 0 : i32
    %c0_i32_0 = arith.constant 0 : i32
    %c0_i32_1 = arith.constant 0 : i32
    return %c0_i32, %c0_i32_0 : i32, i32
  }
  func.func @transform_4(%arg0: i32) -> (i32, i32) {
    %c0_i32 = arith.constant 0 : i32
    %c0_i32_0 = arith.constant 0 : i32
    return %arg0, %c0_i32 : i32, i32
  }
  func.func @transform_5(%arg0: i32) -> (i32, i32) {
    %c0_i32 = arith.constant 0 : i32
    %c0_i32_0 = arith.constant 0 : i32
    return %arg0, %c0_i32 : i32, i32
  }
  func.func @transform_6(%arg0: i32) -> (i32, i32) {
    %c0_i32 = arith.constant 0 : i32
    %c0_i32_0 = arith.constant 0 : i32
    return %arg0, %c0_i32 : i32, i32
  }
}

</mosaic_0001>

<llo_original>
// kernel: tpu_custom_call.1
$region0: #{tpu_custom_call.1}
  #allocation0 [shape = 'u32[]', space=smem, size = 0x4, offset = 0x4, fixed_abs, tag = 'smem constant byte address 0x4 - core index']
  #allocation1 [shape = 'u32[144,128]{1,0:T(1,128)}', space=vmem, size = 0x12000, scoped, tag = 'internal scratch']
  %s0 = inlined_call_operand.hbm [shape: f32[16,32], index: 0, kind: input, shape index: {}]
  %s1 = inlined_call_operand.hbm [shape: f32[32,32], index: 1, kind: input, shape index: {}]
  %s2 = inlined_call_operand.hbm [shape: f32[32,32], index: 2, kind: input, shape index: {}]
  %s3 = inlined_call_operand.hbm [shape: f32[32,32], index: 3, kind: input, shape index: {}]
  %s4 = inlined_call_operand.hbm [shape: f32[16,32], index: 4, kind: output, shape index: {0}]
  %s5 = inlined_call_operand.hbm [shape: f32[16,32], index: 5, kind: output, shape index: {1}]
  %s6 = inlined_call_operand.hbm [shape: f32[16,32], index: 6, kind: output, shape index: {2}]
  %7 = xla_tuple %s4, %s5, %s6
  %s8 = sld [smem:[#allocation0]]
  $region58: #{tpu_custom_call.1} parent=0
    _
  %s10 = ssub.s32 1, %s8
  %s11 = scalar_select 0, %s10, %s8
  $region1: #{tpu_custom_call.1} parent=0
    #allocation2 [shape = 'u8[8192]{0}', space=vmem, size = 0x2000, scoped, tag = 'input window, operand 0, single buffered']
    #allocation3 [shape = 's32[1]{0}', space=sflag, size = 0x4, scoped, tag = 'scoped memory for tpu_custom_call.1']
    #allocation4 [shape = 's32[1]{0}', space=sflag, size = 0x4, scoped, tag = 'scoped memory for tpu_custom_call.1']
    #allocation5 [shape = 'u8[16384]{0}', space=vmem, size = 0x4000, scoped, tag = 'input window, operand 1, single buffered']
    #allocation6 [shape = 's32[1]{0}', space=sflag, size = 0x4, scoped, tag = 'scoped memory for tpu_custom_call.1']
    #allocation7 [shape = 'u8[16384]{0}', space=vmem, size = 0x4000, scoped, tag = 'input window, operand 2, single buffered']
    #allocation8 [shape = 'u8[16384]{0}', space=vmem, size = 0x4000, scoped, tag = 'input window, operand 3, single buffered']
    #allocation9 [shape = 's32[1]{0}', space=sflag, size = 0x4, scoped, tag = 'scoped memory for tpu_custom_call.1']
    #allocation10 [shape = 'u8[8192]{0}', space=vmem, size = 0x2000, scoped, tag = 'output window, operand 0, single buffered']
    #allocation11 [shape = 'u8[8192]{0}', space=vmem, size = 0x2000, scoped, tag = 'output window, operand 1, single buffered']
    #allocation12 [shape = 's32[1]{0}', space=sflag, size = 0x4, scoped, tag = 'scoped memory for tpu_custom_call.1']
    #allocation13 [shape = 'u8[8192]{0}', space=vmem, size = 0x2000, scoped, tag = 'output window, operand 2, single buffered']
    %12 = vsyncpa [#allocation3], 0
    %13 = vsyncpa [#allocation6], 0
    %14 = vsyncpa [#allocation9], 0
    %15 = vsyncpa [#allocation4], 0
    %16 = vsyncpa [#allocation12], 0
    // Predicated region
    $region2: #{tpu_custom_call.1} parent=1 // pred_check
      _
    $region3: #{tpu_custom_call.1} parent=1 // pred_check_branch
      %18 = sbr.rel (0) target = $region5
    $region4: #{tpu_custom_call.1} parent=1 // pred_region
      %s20 = ssub.s32 256, 256
      %21 = vsyncadd [#allocation3], %s20
      %s22 = sshll.u32 [#allocation2], 4
      %s23 = int_to_ptr.vmem [resolvable:$true] %s22
      %28 = dma.hbm_to_vmem [thread:$0]  %s0, 256, %s23, [#allocation3], 128, 128, 8
    $region5: #{tpu_custom_call.1} parent=1 // pred_fallthru
      _
    // Predicated region
    $region6: #{tpu_custom_call.1} parent=1 // pred_check
      _
    $region7: #{tpu_custom_call.1} parent=1 // pred_check_branch
      %30 = sbr.rel (0) target = $region9
    $region8: #{tpu_custom_call.1} parent=1 // pred_region
      %s32 = ssub.s32 512, 512
      %33 = vsyncadd [#allocation6], %s32
      %s34 = sshll.u32 [#allocation5], 4
      %s35 = int_to_ptr.vmem [resolvable:$true] %s34
      %40 = dma.hbm_to_vmem [thread:$0]  %s1, 512, %s35, [#allocation6], 128, 128, 8
    $region9: #{tpu_custom_call.1} parent=1 // pred_fallthru
      _
    // Predicated region
    $region10: #{tpu_custom_call.1} parent=1 // pred_check
      _
    $region11: #{tpu_custom_call.1} parent=1 // pred_check_branch
      %42 = sbr.rel (0) target = $region13
    $region12: #{tpu_custom_call.1} parent=1 // pred_region
      %s44 = ssub.s32 512, 512
      %45 = vsyncadd [#allocation6], %s44
      %s46 = sshll.u32 [#allocation7], 4
      %s47 = int_to_ptr.vmem [resolvable:$true] %s46
      %52 = dma.hbm_to_vmem [thread:$0]  %s2, 512, %s47, [#allocation6], 128, 128, 8
    $region13: #{tpu_custom_call.1} parent=1 // pred_fallthru
      _
    // Predicated region
    $region14: #{tpu_custom_call.1} parent=1 // pred_check
      _
    $region15: #{tpu_custom_call.1} parent=1 // pred_check_branch
      %54 = sbr.rel (0) target = $region17
    $region16: #{tpu_custom_call.1} parent=1 // pred_region
      %s56 = ssub.s32 512, 512
      %57 = vsyncadd [#allocation9], %s56
      %s58 = sshll.u32 [#allocation8], 4
      %s59 = int_to_ptr.vmem [resolvable:$true] %s58
      %64 = dma.hbm_to_vmem [thread:$0]  %s3, 512, %s59, [#allocation9], 128, 128, 8
    $region17: #{tpu_custom_call.1} parent=1 // pred_fallthru
      _
    // Predicated region
    $region18: #{tpu_custom_call.1} parent=1 // pred_check
      _
    $region19: #{tpu_custom_call.1} parent=1 // pred_check_branch
      %66 = sbr.rel (0) target = $region21
    $region20: #{tpu_custom_call.1} parent=1 // pred_region
      %67 = dma.done [#allocation3], 256
    $region21: #{tpu_custom_call.1} parent=1 // pred_fallthru
      _
    // Predicated region
    $region22: #{tpu_custom_call.1} parent=1 // pred_check
      _
    $region23: #{tpu_custom_call.1} parent=1 // pred_check_branch
      %69 = sbr.rel (0) target = $region25
    $region24: #{tpu_custom_call.1} parent=1 // pred_region
      %70 = dma.done [#allocation6], 512
    $region25: #{tpu_custom_call.1} parent=1 // pred_fallthru
      _
    // Predicated region
    $region26: #{tpu_custom_call.1} parent=1 // pred_check
      _
    $region27: #{tpu_custom_call.1} parent=1 // pred_check_branch
      %72 = sbr.rel (0) target = $region29
    $region28: #{tpu_custom_call.1} parent=1 // pred_region
      %73 = dma.done [#allocation6], 512
    $region29: #{tpu_custom_call.1} parent=1 // pred_fallthru
      _
    // Predicated region
    $region30: #{tpu_custom_call.1} parent=1 // pred_check
      _
    $region31: #{tpu_custom_call.1} parent=1 // pred_check_branch
      %75 = sbr.rel (0) target = $region33
    $region32: #{tpu_custom_call.1} parent=1 // pred_region
      %76 = dma.done [#allocation9], 512
    $region33: #{tpu_custom_call.1} parent=1 // pred_fallthru
      _
    %v77 = vld [vmem:[#allocation2] sm:$0xff]
    %v78 = vld [vmem:[#allocation2 + $0x8] sm:$0xff]
    %v79 = vld [vmem:[#allocation5] sm:$0xff]
    %v80 = vld [vmem:[#allocation5 + $0x8] sm:$0xff]
    %v81 = vld [vmem:[#allocation5 + $0x10] sm:$0xff]
    %v82 = vld [vmem:[#allocation5 + $0x18] sm:$0xff]
    %vm83 = vcmask 261120
    %v85 = vsel %vm83, %v77, 0
    %v88 = vsel %vm83, %v78, 0
    %90 = vmatprep.subr.mxu0 0.0
    %91 = vmatpush1.msra.mxu0 %v79
    %92 = vmatprep.subr.mxu0 0.0
    %93 = vmatpush1.msra.mxu0 %v80
    %94 = vmatprep.subr.mxu0 0.0
    %95 = vmatpush1.msra.mxu0 %v81
    %96 = vmatprep.subr.mxu0 0.0
    %97 = vmatpush1.msra.mxu0 %v82
    %98 = vmatprep.subr.mxu0 0.0
    %99 = vmatpush1.msra.mxu0 0.0
    %100 = vmatprep.subr.mxu0 0.0
    %101 = vmatpush1.msra.mxu0 0.0
    %102 = vmatprep.subr.mxu0 0.0
    %103 = vmatpush1.msra.mxu0 0.0
    %104 = vmatprep.subr.mxu0 0.0
    %105 = vmatpush1.msra.mxu0 0.0
    %106 = vmatprep.subr.mxu0 0.0
    %107 = vmatpush1.msra.mxu0 0.0
    %108 = vmatprep.subr.mxu0 0.0
    %109 = vmatpush1.msra.mxu0 0.0
    %110 = vmatprep.subr.mxu0 0.0
    %111 = vmatpush1.msra.mxu0 0.0
    %112 = vmatprep.subr.mxu0 0.0
    %113 = vmatpush1.msra.mxu0 0.0
    %114 = vmatprep.subr.mxu0 0.0
    %115 = vmatpush1.msra.mxu0 0.0
    %116 = vmatprep.subr.mxu0 0.0
    %117 = vmatpush1.msra.mxu0 0.0
    %118 = vmatprep.subr.mxu0 0.0
    %119 = vmatpush1.msra.mxu0 0.0
    %120 = vmatprep.subr.mxu0 0.0
    %121 = vmatpush1.msra.mxu0 0.0
    %122 = vmatprep.subr.mxu0 0.0
    %123 = vmatpush1.msra.mxu0 0.0
    %124 = vmatprep.subr.mxu0 0.0
    %125 = vmatpush1.msra.mxu0 0.0
    %126 = vmatprep.subr.mxu0 0.0
    %127 = vmatpush1.msra.mxu0 0.0
    %128 = vmatprep.subr.mxu0 0.0
    %129 = vmatpush1.msra.mxu0 0.0
    %130 = vmatprep.subr.mxu0 0.0
    %131 = vmatpush1.msra.mxu0 0.0
    %132 = vmatprep.subr.mxu0 0.0
    %133 = vmatpush1.msra.mxu0 0.0
    %134 = vmatprep.subr.mxu0 0.0
    %135 = vmatpush1.msra.mxu0 0.0
    %136 = vmatprep.subr.mxu0 0.0
    %137 = vmatpush1.msra.mxu0 0.0
    %138 = vmatprep.subr.mxu0 0.0
    %139 = vmatpush1.msra.mxu0 0.0
    %140 = vmatprep.subr.mxu0 0.0
    %141 = vmatpush1.msra.mxu0 0.0
    %142 = vmatprep.subr.mxu0 0.0
    %143 = vmatpush1.msra.mxu0 0.0
    %144 = vmatprep.subr.mxu0 0.0
    %145 = vmatpush1.msra.mxu0 0.0
    %146 = vmatprep.subr.mxu0 0.0
    %147 = vmatpush1.msra.mxu0 0.0
    %148 = vmatprep.subr.mxu0 0.0
    %149 = vmatpush1.msra.mxu0 0.0
    %150 = vmatprep.subr.mxu0 0.0
    %151 = vmatpush1.msra.mxu0 0.0
    %152 = vmatprep.subr.mxu0 0.0
    %153 = vmatpush1.msra.mxu0 0.0
    %154 = vmatprep.mubr.f32.mxu0 0.0
    %155 = vmatmul.mubr.f32.gmra.mrb[0].mxu0 %v85
    %v156 = vpop.f32.mrb[0].mxu0
    %v157 = vadd.f32 0.0, %v156
    %v158 = vpop.f32.mrb[0].mxu0
    %159 = vmatprep.mubr.f32.mxu0 0.0
    %160 = vmatmul.mubr.f32.gmra.mrb[0].mxu0 %v88
    %v161 = vpop.f32.mrb[0].mxu0
    %v162 = vadd.f32 0.0, %v161
    %v163 = vpop.f32.mrb[0].mxu0
    %164 = vdwg.mxu0
    %165 = vst.msk [vmem:[#allocation10] sm:$0xff] %vm83, %v157
    %166 = vst.msk [vmem:[#allocation10 + $0x8] sm:$0xff] %vm83, %v162
    %v167 = vld [vmem:[#allocation7] sm:$0xff]
    %v168 = vld [vmem:[#allocation7 + $0x8] sm:$0xff]
    %v169 = vld [vmem:[#allocation7 + $0x10] sm:$0xff]
    %v170 = vld [vmem:[#allocation7 + $0x18] sm:$0xff]
    %171 = vmatprep.subr.mxu0 0.0
    %172 = vmatpush1.msra.mxu0 %v167
    %173 = vmatprep.subr.mxu0 0.0
    %174 = vmatpush1.msra.mxu0 %v168
    %175 = vmatprep.subr.mxu0 0.0
    %176 = vmatpush1.msra.mxu0 %v169
    %177 = vmatprep.subr.mxu0 0.0
    %178 = vmatpush1.msra.mxu0 %v170
    %179 = vmatprep.subr.mxu0 0.0
    %180 = vmatpush1.msra.mxu0 0.0
    %181 = vmatprep.subr.mxu0 0.0
    %182 = vmatpush1.msra.mxu0 0.0
    %183 = vmatprep.subr.mxu0 0.0
    %184 = vmatpush1.msra.mxu0 0.0
    %185 = vmatprep.subr.mxu0 0.0
    %186 = vmatpush1.msra.mxu0 0.0
    %187 = vmatprep.subr.mxu0 0.0
    %188 = vmatpush1.msra.mxu0 0.0
    %189 = vmatprep.subr.mxu0 0.0
    %190 = vmatpush1.msra.mxu0 0.0
    %191 = vmatprep.subr.mxu0 0.0
    %192 = vmatpush1.msra.mxu0 0.0
    %193 = vmatprep.subr.mxu0 0.0
    %194 = vmatpush1.msra.mxu0 0.0
    %195 = vmatprep.subr.mxu0 0.0
    %196 = vmatpush1.msra.mxu0 0.0
    %197 = vmatprep.subr.mxu0 0.0
    %198 = vmatpush1.msra.mxu0 0.0
    %199 = vmatprep.subr.mxu0 0.0
    %200 = vmatpush1.msra.mxu0 0.0
    %201 = vmatprep.subr.mxu0 0.0
    %202 = vmatpush1.msra.mxu0 0.0
    %203 = vmatprep.subr.mxu0 0.0
    %204 = vmatpush1.msra.mxu0 0.0
    %205 = vmatprep.subr.mxu0 0.0
    %206 = vmatpush1.msra.mxu0 0.0
    %207 = vmatprep.subr.mxu0 0.0
    %208 = vmatpush1.msra.mxu0 0.0
    %209 = vmatprep.subr.mxu0 0.0
    %210 = vmatpush1.msra.mxu0 0.0
    %211 = vmatprep.subr.mxu0 0.0
    %212 = vmatpush1.msra.mxu0 0.0
    %213 = vmatprep.subr.mxu0 0.0
    %214 = vmatpush1.msra.mxu0 0.0
    %215 = vmatprep.subr.mxu0 0.0
    %216 = vmatpush1.msra.mxu0 0.0
    %217 = vmatprep.subr.mxu0 0.0
    %218 = vmatpush1.msra.mxu0 0.0
    %219 = vmatprep.subr.mxu0 0.0
    %220 = vmatpush1.msra.mxu0 0.0
    %221 = vmatprep.subr.mxu0 0.0
    %222 = vmatpush1.msra.mxu0 0.0
    %223 = vmatprep.subr.mxu0 0.0
    %224 = vmatpush1.msra.mxu0 0.0
    %225 = vmatprep.subr.mxu0 0.0
    %226 = vmatpush1.msra.mxu0 0.0
    %227 = vmatprep.subr.mxu0 0.0
    %228 = vmatpush1.msra.mxu0 0.0
    %229 = vmatprep.subr.mxu0 0.0
    %230 = vmatpush1.msra.mxu0 0.0
    %231 = vmatprep.subr.mxu0 0.0
    %232 = vmatpush1.msra.mxu0 0.0
    %233 = vmatprep.subr.mxu0 0.0
    %234 = vmatpush1.msra.mxu0 0.0
    %235 = vmatprep.mubr.f32.mxu0 0.0
    %236 = vmatmul.mubr.f32.gmra.mrb[0].mxu0 %v85
    %v237 = vpop.f32.mrb[0].mxu0
    %v238 = vadd.f32 0.0, %v237
    %v239 = vpop.f32.mrb[0].mxu0
    %240 = vmatprep.mubr.f32.mxu0 0.0
    %241 = vmatmul.mubr.f32.gmra.mrb[0].mxu0 %v88
    %v242 = vpop.f32.mrb[0].mxu0
    %v243 = vadd.f32 0.0, %v242
    %v244 = vpop.f32.mrb[0].mxu0
    %245 = vdwg.mxu0
    %246 = vst.msk [vmem:[#allocation11] sm:$0xff] %vm83, %v238
    %247 = vst.msk [vmem:[#allocation11 + $0x8] sm:$0xff] %vm83, %v243
    %v248 = vld [vmem:[#allocation8] sm:$0xff]
    %v249 = vld [vmem:[#allocation8 + $0x8] sm:$0xff]
    %v250 = vld [vmem:[#allocation8 + $0x10] sm:$0xff]
    %v251 = vld [vmem:[#allocation8 + $0x18] sm:$0xff]
    %252 = vmatprep.subr.mxu0 0.0
    %253 = vmatpush1.msra.mxu0 %v248
    %254 = vmatprep.subr.mxu0 0.0
    %255 = vmatpush1.msra.mxu0 %v249
    %256 = vmatprep.subr.mxu0 0.0
    %257 = vmatpush1.msra.mxu0 %v250
    %258 = vmatprep.subr.mxu0 0.0
    %259 = vmatpush1.msra.mxu0 %v251
    %260 = vmatprep.subr.mxu0 0.0
    %261 = vmatpush1.msra.mxu0 0.0
    %262 = vmatprep.subr.mxu0 0.0
    %263 = vmatpush1.msra.mxu0 0.0
    %264 = vmatprep.subr.mxu0 0.0
    %265 = vmatpush1.msra.mxu0 0.0
    %266 = vmatprep.subr.mxu0 0.0
    %267 = vmatpush1.msra.mxu0 0.0
    %268 = vmatprep.subr.mxu0 0.0
    %269 = vmatpush1.msra.mxu0 0.0
    %270 = vmatprep.subr.mxu0 0.0
    %271 = vmatpush1.msra.mxu0 0.0
    %272 = vmatprep.subr.mxu0 0.0
    %273 = vmatpush1.msra.mxu0 0.0
    %274 = vmatprep.subr.mxu0 0.0
    %275 = vmatpush1.msra.mxu0 0.0
    %276 = vmatprep.subr.mxu0 0.0
    %277 = vmatpush1.msra.mxu0 0.0
    %278 = vmatprep.subr.mxu0 0.0
    %279 = vmatpush1.msra.mxu0 0.0
    %280 = vmatprep.subr.mxu0 0.0
    %281 = vmatpush1.msra.mxu0 0.0
    %282 = vmatprep.subr.mxu0 0.0
    %283 = vmatpush1.msra.mxu0 0.0
    %284 = vmatprep.subr.mxu0 0.0
    %285 = vmatpush1.msra.mxu0 0.0
    %286 = vmatprep.subr.mxu0 0.0
    %287 = vmatpush1.msra.mxu0 0.0
    %288 = vmatprep.subr.mxu0 0.0
    %289 = vmatpush1.msra.mxu0 0.0
    %290 = vmatprep.subr.mxu0 0.0
    %291 = vmatpush1.msra.mxu0 0.0
    %292 = vmatprep.subr.mxu0 0.0
    %293 = vmatpush1.msra.mxu0 0.0
    %294 = vmatprep.subr.mxu0 0.0
    %295 = vmatpush1.msra.mxu0 0.0
    %296 = vmatprep.subr.mxu0 0.0
    %297 = vmatpush1.msra.mxu0 0.0
    %298 = vmatprep.subr.mxu0 0.0
    %299 = vmatpush1.msra.mxu0 0.0
    %300 = vmatprep.subr.mxu0 0.0
    %301 = vmatpush1.msra.mxu0 0.0
    %302 = vmatprep.subr.mxu0 0.0
    %303 = vmatpush1.msra.mxu0 0.0
    %304 = vmatprep.subr.mxu0 0.0
    %305 = vmatpush1.msra.mxu0 0.0
    %306 = vmatprep.subr.mxu0 0.0
    %307 = vmatpush1.msra.mxu0 0.0
    %308 = vmatprep.subr.mxu0 0.0
    %309 = vmatpush1.msra.mxu0 0.0
    %310 = vmatprep.subr.mxu0 0.0
    %311 = vmatpush1.msra.mxu0 0.0
    %312 = vmatprep.subr.mxu0 0.0
    %313 = vmatpush1.msra.mxu0 0.0
    %314 = vmatprep.subr.mxu0 0.0
    %315 = vmatpush1.msra.mxu0 0.0
    %316 = vmatprep.mubr.f32.mxu0 0.0
    %317 = vmatmul.mubr.f32.gmra.mrb[0].mxu0 %v85
    %v318 = vpop.f32.mrb[0].mxu0
    %v319 = vadd.f32 0.0, %v318
    %v320 = vpop.f32.mrb[0].mxu0
    %321 = vmatprep.mubr.f32.mxu0 0.0
    %322 = vmatmul.mubr.f32.gmra.mrb[0].mxu0 %v88
    %v323 = vpop.f32.mrb[0].mxu0
    %v324 = vadd.f32 0.0, %v323
    %v325 = vpop.f32.mrb[0].mxu0
    %326 = vdwg.mxu0
    %327 = vst.msk [vmem:[#allocation13] sm:$0xff] %vm83, %v319
    %328 = vst.msk [vmem:[#allocation13 + $0x8] sm:$0xff] %vm83, %v324
    // Predicated region
    $region34: #{tpu_custom_call.1} parent=1 // pred_check
      _
    $region35: #{tpu_custom_call.1} parent=1 // pred_check_branch
      %330 = sbr.rel (0) target = $region37
    $region36: #{tpu_custom_call.1} parent=1 // pred_region
      %s332 = ssub.s32 256, 256
      %333 = vsyncadd [#allocation4], %s332
      %s334 = sshll.u32 [#allocation10], 4
      %s335 = int_to_ptr.vmem [resolvable:$true] %s334
      %340 = dma.vmem_to_hbm [thread:$0]  %s335, 256, %s4, [#allocation4], 128, 128, 8
    $region37: #{tpu_custom_call.1} parent=1 // pred_fallthru
      _
    // Predicated region
    $region38: #{tpu_custom_call.1} parent=1 // pred_check
      _
    $region39: #{tpu_custom_call.1} parent=1 // pred_check_branch
      %342 = sbr.rel (0) target = $region41
    $region40: #{tpu_custom_call.1} parent=1 // pred_region
      %s344 = ssub.s32 256, 256
      %345 = vsyncadd [#allocation12], %s344
      %s346 = sshll.u32 [#allocation11], 4
      %s347 = int_to_ptr.vmem [resolvable:$true] %s346
      %352 = dma.vmem_to_hbm [thread:$0]  %s347, 256, %s5, [#allocation12], 128, 128, 8
    $region41: #{tpu_custom_call.1} parent=1 // pred_fallthru
      _
    // Predicated region
    $region42: #{tpu_custom_call.1} parent=1 // pred_check
      _
    $region43: #{tpu_custom_call.1} parent=1 // pred_check_branch
      %354 = sbr.rel (0) target = $region45
    $region44: #{tpu_custom_call.1} parent=1 // pred_region
      %s356 = ssub.s32 256, 256
      %357 = vsyncadd [#allocation12], %s356
      %s358 = sshll.u32 [#allocation13], 4
      %s359 = int_to_ptr.vmem [resolvable:$true] %s358
      %364 = dma.vmem_to_hbm [thread:$0]  %s359, 256, %s6, [#allocation12], 128, 128, 8
    $region45: #{tpu_custom_call.1} parent=1 // pred_fallthru
      _
    // Predicated region
    $region46: #{tpu_custom_call.1} parent=1 // pred_check
      _
    $region47: #{tpu_custom_call.1} parent=1 // pred_check_branch
      %366 = sbr.rel (0) target = $region49
    $region48: #{tpu_custom_call.1} parent=1 // pred_region
      %367 = dma.done [#allocation4], 256
    $region49: #{tpu_custom_call.1} parent=1 // pred_fallthru
      _
    // Predicated region
    $region50: #{tpu_custom_call.1} parent=1 // pred_check
      _
    $region51: #{tpu_custom_call.1} parent=1 // pred_check_branch
      %369 = sbr.rel (0) target = $region53
    $region52: #{tpu_custom_call.1} parent=1 // pred_region
      %370 = dma.done [#allocation12], 256
    $region53: #{tpu_custom_call.1} parent=1 // pred_fallthru
      _
    // Predicated region
    $region54: #{tpu_custom_call.1} parent=1 // pred_check
      _
    $region55: #{tpu_custom_call.1} parent=1 // pred_check_branch
      %372 = sbr.rel (0) target = $region57
    $region56: #{tpu_custom_call.1} parent=1 // pred_region
      %373 = dma.done [#allocation12], 256
    $region57: #{tpu_custom_call.1} parent=1 // pred_fallthru
      _
    %374 = vsyncpa [#allocation3], 1
    %375 = vsyncpa [#allocation6], 1
    %376 = vsyncpa [#allocation9], 1
    %377 = vsyncpa [#allocation4], 1
    %378 = vsyncpa [#allocation12], 1

</llo_original>
